<compile_context>
chip_gen: v5e
topology: v5e:2x2
jax: 0.10.0
libtpu: 0.0.40
codegen_flags: <defaults>
</compile_context>

<pallas_src>
import functools

import jax
import jax.numpy as jnp
from jax import lax
from jax.experimental import pallas as pl
from jax.experimental.pallas import tpu as pltpu


def _round_up(v, m):
    return (v + m - 1) // m * m


# ----------------------------------------------------------------------------
# Fused kernel body
# ----------------------------------------------------------------------------
def _fused_block_kernel(H, W, eps,
                        x_ref, w1_ref, b1_ref, g1_ref, bt1_ref,
                        w2_ref, b2_ref, g2_ref, bt2_ref, o_ref):
    nhw = x_ref.shape[1]
    HW = H * W

    # --- per-image edge masks, built once per sublane-count and reused -------
    mask_cache = {}

    def edge_masks(sub):
        if sub in mask_cache:
            return mask_cache[sub]
        pos = lax.broadcasted_iota(jnp.int32, (sub, nhw), 1)
        # per-image pixel index (batch is folded onto lanes)
        if HW & (HW - 1) == 0:
            p = pos & (HW - 1)
        else:
            p = pos % HW
        if W & (W - 1) == 0:
            lg = W.bit_length() - 1
            row = p >> lg
            col = p & (W - 1)
        else:
            row = p // W
            col = p % W
        d = {}
        for dy in (-1, 0, 1):
            for dx in (-1, 0, 1):
                conds = []
                if dy < 0:
                    conds.append(row >= -dy)
                elif dy > 0:
                    conds.append(row < H - dy)
                if dx < 0:
                    conds.append(col >= -dx)
                elif dx > 0:
                    conds.append(col < W - dx)
                m = None
                for c in conds:
                    m = c if m is None else (m & c)
                d[(dy, dx)] = m
        mask_cache[sub] = d
        return d

    # --- im2col via lane rotations (XLU) + edge masks -------------------------
    def im2col(xc):
        d = edge_masks(xc.shape[0])
        taps = []
        for dy in (-1, 0, 1):
            for dx in (-1, 0, 1):
                off = dy * W + dx
                if off == 0:
                    shifted = xc
                else:
                    # out[p] = x[p + off]
                    shifted = pltpu.roll(xc, (-off) % nhw, axis=1)
                m = d[(dy, dx)]
                if m is not None:
                    shifted = jnp.where(m, shifted, 0.0)
                taps.append(shifted)
        return jnp.concatenate(taps, axis=0)   # (9*C_pad, N*HW), sublane aligned

    # --- train-mode BN (batch stats over all N*HW lanes) + ReLU ---------------
    def bn_relu(y, g, bt):
        inv_n = 1.0 / y.shape[1]
        mean = jnp.sum(y, axis=1, keepdims=True) * inv_n
        d = y - mean
        var = jnp.sum(d * d, axis=1, keepdims=True) * inv_n     # biased variance
        scale = g * lax.rsqrt(var + eps)
        return jnp.maximum(d * scale + bt, 0.0)

    # conv1 -> BN1 -> ReLU
    y1 = jnp.dot(w1_ref[...], im2col(x_ref[...]),
                 preferred_element_type=jnp.float32) + b1_ref[...]
    h1 = bn_relu(y1, g1_ref[...], bt1_ref[...])

    # conv2 -> BN2 -> ReLU
    y2 = jnp.dot(w2_ref[...], im2col(h1),
                 preferred_element_type=jnp.float32) + b2_ref[...]
    o_ref[...] = bn_relu(y2, g2_ref[...], bt2_ref[...]).astype(o_ref.dtype)


# ----------------------------------------------------------------------------
# Glue: weight packing (with channel padding to multiples of 8), forward
# ----------------------------------------------------------------------------
def _pack_w(w, i_pad, o_pad):
    # PyTorch OIHW (O, I, 3, 3) -> (O_pad, 9*I_pad); column k*I_pad + i with
    # tap k = ky*3 + kx (matches the im2col tap order above).
    o, i, kh, kw = w.shape
    wt = jnp.transpose(w, (0, 2, 3, 1)).reshape(o, kh * kw, i)
    wp = jnp.zeros((o_pad, kh * kw, i_pad), w.dtype).at[:o, :, :i].set(wt)
    return wp.reshape(o_pad, kh * kw * i_pad)


def _pad_col(v, c_pad):
    return jnp.zeros((c_pad, 1), v.dtype).at[:v.shape[0], 0].set(v)


def basic_conv_block_forward(params, x, eps=1e-5):
    n, cin, H, W = x.shape
    nhw = n * H * W
    c_mid = params["w1"].shape[0]
    c_out = params["w2"].shape[0]
    cin_p = _round_up(cin, 8)
    cmid_p = _round_up(c_mid, 8)
    cout_p = _round_up(c_out, 8)

    # (N, C, H, W) -> channel-major (C_pad, N*H*W): each image's H*W pixels are
    # contiguous along the lane axis, batch folded onto lanes.
    xf = jnp.transpose(x, (1, 0, 2, 3)).reshape(cin, nhw)
    xf = jnp.zeros((cin_p, nhw), x.dtype).at[:cin].set(xf)

    w1 = _pack_w(params["w1"], cin_p, cmid_p)
    w2 = _pack_w(params["w2"], cmid_p, cout_p)
    b1 = _pad_col(params["b1"], cmid_p)
    g1 = _pad_col(params["g1"], cmid_p)
    t1 = _pad_col(params["bt1"], cmid_p)
    b2 = _pad_col(params["b2"], cout_p)
    g2 = _pad_col(params["g2"], cout_p)
    t2 = _pad_col(params["bt2"], cout_p)

    y = pl.pallas_call(
        functools.partial(_fused_block_kernel, H, W, eps),
        out_shape=jax.ShapeDtypeStruct((cout_p, nhw), jnp.float32),
        grid_spec=pltpu.PrefetchScalarGridSpec(
            num_scalar_prefetch=0,
            grid=(1,),
            in_specs=[
                pl.BlockSpec((cin_p, nhw), lambda i: (0, 0)),
                pl.BlockSpec((cmid_p, 9 * cin_p), lambda i: (0, 0)),
                pl.BlockSpec((cmid_p, 1), lambda i: (0, 0)),
                pl.BlockSpec((cmid_p, 1), lambda i: (0, 0)),
                pl.BlockSpec((cmid_p, 1), lambda i: (0, 0)),
                pl.BlockSpec((cout_p, 9 * cmid_p), lambda i: (0, 0)),
                pl.BlockSpec((cout_p, 1), lambda i: (0, 0)),
                pl.BlockSpec((cout_p, 1), lambda i: (0, 0)),
                pl.BlockSpec((cout_p, 1), lambda i: (0, 0)),
            ],
            out_specs=pl.BlockSpec((cout_p, nhw), lambda i: (0, 0)),
        ),
        compiler_params=pltpu.CompilerParams(dimension_semantics=("arbitrary",)),
    )(xf, w1, b1, g1, t1, w2, b2, g2, t2)

    y = y[:c_out]                                        # drop channel padding
    return jnp.transpose(y.reshape(c_out, n, H, W), (1, 0, 2, 3))


# ----------------------------------------------------------------------------
# Pure-JAX reference (PyTorch semantics) for correctness checking
# ----------------------------------------------------------------------------
def ref_forward(params, x, eps=1e-5):
    def conv(x, w, b):
        y = lax.conv_general_dilated(
            x, w, (1, 1), "SAME",
            dimension_numbers=("NCHW", "OIHW", "NCHW"),
            precision=lax.Precision.HIGHEST)
        return y + b.reshape(1, -1, 1, 1)

    def bn_relu(x, g, b):
        mean = jnp.mean(x, axis=(0, 2, 3), keepdims=True)
        var = jnp.mean((x - mean) ** 2, axis=(0, 2, 3), keepdims=True)
        xn = (x - mean) / jnp.sqrt(var + eps) * g.reshape(1, -1, 1, 1) + b.reshape(1, -1, 1, 1)
        return jnp.maximum(xn, 0.0)

    h = bn_relu(conv(x, params["w1"], params["b1"]), params["g1"], params["bt1"])
    return bn_relu(conv(h, params["w2"], params["b2"]), params["g2"], params["bt2"])


if __name__ == "__main__":
    N, IN_C, OUT_C, H, W = 2, 4, 8, 16, 16   # BasicConvBlock(4, 8): mid = out = 8

    key = jax.random.PRNGKey(0)
    ks = jax.random.split(key, 9)
    params = {
        "w1": 0.1 * jax.random.normal(ks[0], (OUT_C, IN_C, 3, 3), jnp.float32),
        "b1": 0.1 * jax.random.normal(ks[1], (OUT_C,), jnp.float32),
        "g1": 1.0 + 0.1 * jax.random.normal(ks[2], (OUT_C,), jnp.float32),
        "bt1": 0.1 * jax.random.normal(ks[3], (OUT_C,), jnp.float32),
        "w2": 0.1 * jax.random.normal(ks[4], (OUT_C, OUT_C, 3, 3), jnp.float32),
        "b2": 0.1 * jax.random.normal(ks[5], (OUT_C,), jnp.float32),
        "g2": 1.0 + 0.1 * jax.random.normal(ks[6], (OUT_C,), jnp.float32),
        "bt2": 0.1 * jax.random.normal(ks[7], (OUT_C,), jnp.float32),
    }
    x = jax.random.normal(ks[8], (N, IN_C, H, W), jnp.float32)

    out = jax.jit(basic_conv_block_forward)(params, x)
    out = jax.block_until_ready(out)

    assert out.shape == (N, OUT_C, H, W), out.shape
    assert bool(jnp.all(jnp.isfinite(out)))
    ref = ref_forward(params, x)
    max_err = float(jnp.max(jnp.abs(out - ref)))
    assert jnp.allclose(out, ref, atol=1e-3, rtol=1e-3), max_err
    print("KERNEL_OK")
</pallas_src>

<mosaic_0001>
module attributes {stable_mosaic.version = 11 : i64} {
  func.func @_fused_block_kernel(%arg0: i32, %arg1: memref<8x512xf32, #tpu.memory_space<vmem>>, %arg2: memref<8x72xf32, #tpu.memory_space<vmem>>, %arg3: memref<8x1xf32, #tpu.memory_space<vmem>>, %arg4: memref<8x1xf32, #tpu.memory_space<vmem>>, %arg5: memref<8x1xf32, #tpu.memory_space<vmem>>, %arg6: memref<8x72xf32, #tpu.memory_space<vmem>>, %arg7: memref<8x1xf32, #tpu.memory_space<vmem>>, %arg8: memref<8x1xf32, #tpu.memory_space<vmem>>, %arg9: memref<8x1xf32, #tpu.memory_space<vmem>>, %arg10: memref<8x512xf32, #tpu.memory_space<vmem>>) attributes {dimension_semantics = [#tpu.dimension_semantics<arbitrary>], iteration_bounds = array<i64: 1>, scalar_prefetch = 0 : i64, scratch_operands = 0 : i64, tpu.core_type = #tpu.core_type<tc>, window_params = [{pipeline_mode = #tpu.pipeline_mode<synchronous>, transform_indices = @transform_0, window_bounds = array<i64: 8, 512>}, {pipeline_mode = #tpu.pipeline_mode<synchronous>, transform_indices = @transform_1, window_bounds = array<i64: 8, 72>}, {pipeline_mode = #tpu.pipeline_mode<synchronous>, transform_indices = @transform_2, window_bounds = array<i64: 8, 1>}, {pipeline_mode = #tpu.pipeline_mode<synchronous>, transform_indices = @transform_3, window_bounds = array<i64: 8, 1>}, {pipeline_mode = #tpu.pipeline_mode<synchronous>, transform_indices = @transform_4, window_bounds = array<i64: 8, 1>}, {pipeline_mode = #tpu.pipeline_mode<synchronous>, transform_indices = @transform_5, window_bounds = array<i64: 8, 72>}, {pipeline_mode = #tpu.pipeline_mode<synchronous>, transform_indices = @transform_6, window_bounds = array<i64: 8, 1>}, {pipeline_mode = #tpu.pipeline_mode<synchronous>, transform_indices = @transform_7, window_bounds = array<i64: 8, 1>}, {pipeline_mode = #tpu.pipeline_mode<synchronous>, transform_indices = @transform_8, window_bounds = array<i64: 8, 1>}, {pipeline_mode = #tpu.pipeline_mode<synchronous>, transform_indices = @transform_9, window_bounds = array<i64: 8, 512>}]} {
    %c0 = arith.constant 0 : index
    %c0_0 = arith.constant 0 : index
    %0 = vector.load %arg2[%c0, %c0_0] : memref<8x72xf32, #tpu.memory_space<vmem>>, vector<8x72xf32>
    %c0_1 = arith.constant 0 : index
    %c0_2 = arith.constant 0 : index
    %1 = vector.load %arg1[%c0_1, %c0_2] : memref<8x512xf32, #tpu.memory_space<vmem>>, vector<8x512xf32>
    %2 = tpu.iota {dimensions = array<i32: 1>} : vector<8x512xi32>
    %c255_i32 = arith.constant 255 : i32
    %3 = vector.broadcast %c255_i32 : i32 to vector<8x512xi32>
    %4 = arith.andi %2, %3 : vector<8x512xi32>
    %c4_i32 = arith.constant 4 : i32
    %5 = vector.broadcast %c4_i32 : i32 to vector<8x512xi32>
    %6 = arith.shrsi %4, %5 : vector<8x512xi32>
    %c15_i32 = arith.constant 15 : i32
    %7 = vector.broadcast %c15_i32 : i32 to vector<8x512xi32>
    %8 = arith.andi %4, %7 : vector<8x512xi32>
    %c1_i32 = arith.constant 1 : i32
    %9 = vector.broadcast %c1_i32 : i32 to vector<8x512xi32>
    %10 = arith.cmpi sge, %6, %9 : vector<8x512xi32>
    %c1_i32_3 = arith.constant 1 : i32
    %11 = vector.broadcast %c1_i32_3 : i32 to vector<8x512xi32>
    %12 = arith.cmpi sge, %8, %11 : vector<8x512xi32>
    %13 = arith.andi %10, %12 : vector<8x512xi1>
    %c1_i32_4 = arith.constant 1 : i32
    %14 = vector.broadcast %c1_i32_4 : i32 to vector<8x512xi32>
    %15 = arith.cmpi sge, %6, %14 : vector<8x512xi32>
    %c1_i32_5 = arith.constant 1 : i32
    %16 = vector.broadcast %c1_i32_5 : i32 to vector<8x512xi32>
    %17 = arith.cmpi sge, %6, %16 : vector<8x512xi32>
    %c15_i32_6 = arith.constant 15 : i32
    %18 = vector.broadcast %c15_i32_6 : i32 to vector<8x512xi32>
    %19 = arith.cmpi slt, %8, %18 : vector<8x512xi32>
    %20 = arith.andi %17, %19 : vector<8x512xi1>
    %c1_i32_7 = arith.constant 1 : i32
    %21 = vector.broadcast %c1_i32_7 : i32 to vector<8x512xi32>
    %22 = arith.cmpi sge, %8, %21 : vector<8x512xi32>
    %c15_i32_8 = arith.constant 15 : i32
    %23 = vector.broadcast %c15_i32_8 : i32 to vector<8x512xi32>
    %24 = arith.cmpi slt, %8, %23 : vector<8x512xi32>
    %c15_i32_9 = arith.constant 15 : i32
    %25 = vector.broadcast %c15_i32_9 : i32 to vector<8x512xi32>
    %26 = arith.cmpi slt, %6, %25 : vector<8x512xi32>
    %c1_i32_10 = arith.constant 1 : i32
    %27 = vector.broadcast %c1_i32_10 : i32 to vector<8x512xi32>
    %28 = arith.cmpi sge, %8, %27 : vector<8x512xi32>
    %29 = arith.andi %26, %28 : vector<8x512xi1>
    %c15_i32_11 = arith.constant 15 : i32
    %30 = vector.broadcast %c15_i32_11 : i32 to vector<8x512xi32>
    %31 = arith.cmpi slt, %6, %30 : vector<8x512xi32>
    %c15_i32_12 = arith.constant 15 : i32
    %32 = vector.broadcast %c15_i32_12 : i32 to vector<8x512xi32>
    %33 = arith.cmpi slt, %6, %32 : vector<8x512xi32>
    %c15_i32_13 = arith.constant 15 : i32
    %34 = vector.broadcast %c15_i32_13 : i32 to vector<8x512xi32>
    %35 = arith.cmpi slt, %8, %34 : vector<8x512xi32>
    %36 = arith.andi %33, %35 : vector<8x512xi1>
    %c17_i32 = arith.constant 17 : i32
    %37 = tpu.dynamic_rotate %1 by %c17_i32 dim 1 : vector<8x512xf32>, i32 -> vector<8x512xf32>
    %cst = arith.constant 0.000000e+00 : f32
    %38 = vector.broadcast %cst : f32 to vector<8x512xf32>
    %39 = arith.select %13, %37, %38 : vector<8x512xi1>, vector<8x512xf32>
    %c16_i32 = arith.constant 16 : i32
    %40 = tpu.dynamic_rotate %1 by %c16_i32 dim 1 : vector<8x512xf32>, i32 -> vector<8x512xf32>
    %cst_14 = arith.constant 0.000000e+00 : f32
    %41 = vector.broadcast %cst_14 : f32 to vector<8x512xf32>
    %42 = arith.select %15, %40, %41 : vector<8x512xi1>, vector<8x512xf32>
    %c15_i32_15 = arith.constant 15 : i32
    %43 = tpu.dynamic_rotate %1 by %c15_i32_15 dim 1 : vector<8x512xf32>, i32 -> vector<8x512xf32>
    %cst_16 = arith.constant 0.000000e+00 : f32
    %44 = vector.broadcast %cst_16 : f32 to vector<8x512xf32>
    %45 = arith.select %20, %43, %44 : vector<8x512xi1>, vector<8x512xf32>
    %c1_i32_17 = arith.constant 1 : i32
    %46 = tpu.dynamic_rotate %1 by %c1_i32_17 dim 1 : vector<8x512xf32>, i32 -> vector<8x512xf32>
    %cst_18 = arith.constant 0.000000e+00 : f32
    %47 = vector.broadcast %cst_18 : f32 to vector<8x512xf32>
    %48 = arith.select %22, %46, %47 : vector<8x512xi1>, vector<8x512xf32>
    %c511_i32 = arith.constant 511 : i32
    %49 = tpu.dynamic_rotate %1 by %c511_i32 dim 1 : vector<8x512xf32>, i32 -> vector<8x512xf32>
    %cst_19 = arith.constant 0.000000e+00 : f32
    %50 = vector.broadcast %cst_19 : f32 to vector<8x512xf32>
    %51 = arith.select %24, %49, %50 : vector<8x512xi1>, vector<8x512xf32>
    %c497_i32 = arith.constant 497 : i32
    %52 = tpu.dynamic_rotate %1 by %c497_i32 dim 1 : vector<8x512xf32>, i32 -> vector<8x512xf32>
    %cst_20 = arith.constant 0.000000e+00 : f32
    %53 = vector.broadcast %cst_20 : f32 to vector<8x512xf32>
    %54 = arith.select %29, %52, %53 : vector<8x512xi1>, vector<8x512xf32>
    %c496_i32 = arith.constant 496 : i32
    %55 = tpu.dynamic_rotate %1 by %c496_i32 dim 1 : vector<8x512xf32>, i32 -> vector<8x512xf32>
    %cst_21 = arith.constant 0.000000e+00 : f32
    %56 = vector.broadcast %cst_21 : f32 to vector<8x512xf32>
    %57 = arith.select %31, %55, %56 : vector<8x512xi1>, vector<8x512xf32>
    %c495_i32 = arith.constant 495 : i32
    %58 = tpu.dynamic_rotate %1 by %c495_i32 dim 1 : vector<8x512xf32>, i32 -> vector<8x512xf32>
    %cst_22 = arith.constant 0.000000e+00 : f32
    %59 = vector.broadcast %cst_22 : f32 to vector<8x512xf32>
    %60 = arith.select %36, %58, %59 : vector<8x512xi1>, vector<8x512xf32>
    %61 = tpu.concatenate %39, %42, %45, %48, %1, %51, %54, %57, %60 in 0 : vector<8x512xf32>, vector<8x512xf32>, vector<8x512xf32>, vector<8x512xf32>, vector<8x512xf32>, vector<8x512xf32>, vector<8x512xf32>, vector<8x512xf32>, vector<8x512xf32> -> vector<72x512xf32>
    %cst_23 = arith.constant dense<0.000000e+00> : vector<8x512xf32>
    %62 = tpu.matmul %0, %61, %cst_23 {dimension_numbers = #tpu.dot_dimension_numbers<[1], [0], [0], [1], [0, 0, 1, 1], [], []>} : vector<8x72xf32>, vector<72x512xf32>, vector<8x512xf32> -> vector<8x512xf32>
    %c0_24 = arith.constant 0 : index
    %c0_25 = arith.constant 0 : index
    %63 = vector.load %arg3[%c0_24, %c0_25] : memref<8x1xf32, #tpu.memory_space<vmem>>, vector<8x1xf32>
    %64 = vector.broadcast %63 : vector<8x1xf32> to vector<8x512xf32>
    %65 = arith.addf %62, %64 : vector<8x512xf32>
    %c0_26 = arith.constant 0 : index
    %c0_27 = arith.constant 0 : index
    %66 = vector.load %arg4[%c0_26, %c0_27] : memref<8x1xf32, #tpu.memory_space<vmem>>, vector<8x1xf32>
    %c0_28 = arith.constant 0 : index
    %c0_29 = arith.constant 0 : index
    %67 = vector.load %arg5[%c0_28, %c0_29] : memref<8x1xf32, #tpu.memory_space<vmem>>, vector<8x1xf32>
    %cst_30 = arith.constant dense<0.000000e+00> : vector<8xf32>
    %68 = vector.multi_reduction <add>, %65, %cst_30 [1] : vector<8x512xf32> to vector<8xf32>
    %69 = vector.shape_cast %68 : vector<8xf32> to vector<8x1xf32>
    %cst_31 = arith.constant 0.001953125 : f32
    %70 = vector.broadcast %cst_31 : f32 to vector<8x1xf32>
    %71 = arith.mulf %69, %70 : vector<8x1xf32>
    %72 = vector.broadcast %71 : vector<8x1xf32> to vector<8x512xf32>
    %73 = arith.subf %65, %72 : vector<8x512xf32>
    %74 = arith.mulf %73, %73 : vector<8x512xf32>
    %cst_32 = arith.constant dense<0.000000e+00> : vector<8xf32>
    %75 = vector.multi_reduction <add>, %74, %cst_32 [1] : vector<8x512xf32> to vector<8xf32>
    %76 = vector.shape_cast %75 : vector<8xf32> to vector<8x1xf32>
    %cst_33 = arith.constant 0.001953125 : f32
    %77 = vector.broadcast %cst_33 : f32 to vector<8x1xf32>
    %78 = arith.mulf %76, %77 : vector<8x1xf32>
    %cst_34 = arith.constant 9.99999974E-6 : f32
    %79 = vector.broadcast %cst_34 : f32 to vector<8x1xf32>
    %80 = arith.addf %78, %79 : vector<8x1xf32>
    %81 = math.rsqrt %80 : vector<8x1xf32>
    %82 = arith.mulf %66, %81 : vector<8x1xf32>
    %83 = vector.broadcast %82 : vector<8x1xf32> to vector<8x512xf32>
    %84 = arith.mulf %73, %83 : vector<8x512xf32>
    %85 = vector.broadcast %67 : vector<8x1xf32> to vector<8x512xf32>
    %86 = arith.addf %84, %85 : vector<8x512xf32>
    %cst_35 = arith.constant 0.000000e+00 : f32
    %87 = vector.broadcast %cst_35 : f32 to vector<8x512xf32>
    %88 = arith.maximumf %86, %87 : vector<8x512xf32>
    %c0_36 = arith.constant 0 : index
    %c0_37 = arith.constant 0 : index
    %89 = vector.load %arg6[%c0_36, %c0_37] : memref<8x72xf32, #tpu.memory_space<vmem>>, vector<8x72xf32>
    %c17_i32_38 = arith.constant 17 : i32
    %90 = tpu.dynamic_rotate %88 by %c17_i32_38 dim 1 : vector<8x512xf32>, i32 -> vector<8x512xf32>
    %cst_39 = arith.constant 0.000000e+00 : f32
    %91 = vector.broadcast %cst_39 : f32 to vector<8x512xf32>
    %92 = arith.select %13, %90, %91 : vector<8x512xi1>, vector<8x512xf32>
    %c16_i32_40 = arith.constant 16 : i32
    %93 = tpu.dynamic_rotate %88 by %c16_i32_40 dim 1 : vector<8x512xf32>, i32 -> vector<8x512xf32>
    %cst_41 = arith.constant 0.000000e+00 : f32
    %94 = vector.broadcast %cst_41 : f32 to vector<8x512xf32>
    %95 = arith.select %15, %93, %94 : vector<8x512xi1>, vector<8x512xf32>
    %c15_i32_42 = arith.constant 15 : i32
    %96 = tpu.dynamic_rotate %88 by %c15_i32_42 dim 1 : vector<8x512xf32>, i32 -> vector<8x512xf32>
    %cst_43 = arith.constant 0.000000e+00 : f32
    %97 = vector.broadcast %cst_43 : f32 to vector<8x512xf32>
    %98 = arith.select %20, %96, %97 : vector<8x512xi1>, vector<8x512xf32>
    %c1_i32_44 = arith.constant 1 : i32
    %99 = tpu.dynamic_rotate %88 by %c1_i32_44 dim 1 : vector<8x512xf32>, i32 -> vector<8x512xf32>
    %cst_45 = arith.constant 0.000000e+00 : f32
    %100 = vector.broadcast %cst_45 : f32 to vector<8x512xf32>
    %101 = arith.select %22, %99, %100 : vector<8x512xi1>, vector<8x512xf32>
    %c511_i32_46 = arith.constant 511 : i32
    %102 = tpu.dynamic_rotate %88 by %c511_i32_46 dim 1 : vector<8x512xf32>, i32 -> vector<8x512xf32>
    %cst_47 = arith.constant 0.000000e+00 : f32
    %103 = vector.broadcast %cst_47 : f32 to vector<8x512xf32>
    %104 = arith.select %24, %102, %103 : vector<8x512xi1>, vector<8x512xf32>
    %c497_i32_48 = arith.constant 497 : i32
    %105 = tpu.dynamic_rotate %88 by %c497_i32_48 dim 1 : vector<8x512xf32>, i32 -> vector<8x512xf32>
    %cst_49 = arith.constant 0.000000e+00 : f32
    %106 = vector.broadcast %cst_49 : f32 to vector<8x512xf32>
    %107 = arith.select %29, %105, %106 : vector<8x512xi1>, vector<8x512xf32>
    %c496_i32_50 = arith.constant 496 : i32
    %108 = tpu.dynamic_rotate %88 by %c496_i32_50 dim 1 : vector<8x512xf32>, i32 -> vector<8x512xf32>
    %cst_51 = arith.constant 0.000000e+00 : f32
    %109 = vector.broadcast %cst_51 : f32 to vector<8x512xf32>
    %110 = arith.select %31, %108, %109 : vector<8x512xi1>, vector<8x512xf32>
    %c495_i32_52 = arith.constant 495 : i32
    %111 = tpu.dynamic_rotate %88 by %c495_i32_52 dim 1 : vector<8x512xf32>, i32 -> vector<8x512xf32>
    %cst_53 = arith.constant 0.000000e+00 : f32
    %112 = vector.broadcast %cst_53 : f32 to vector<8x512xf32>
    %113 = arith.select %36, %111, %112 : vector<8x512xi1>, vector<8x512xf32>
    %114 = tpu.concatenate %92, %95, %98, %101, %88, %104, %107, %110, %113 in 0 : vector<8x512xf32>, vector<8x512xf32>, vector<8x512xf32>, vector<8x512xf32>, vector<8x512xf32>, vector<8x512xf32>, vector<8x512xf32>, vector<8x512xf32>, vector<8x512xf32> -> vector<72x512xf32>
    %cst_54 = arith.constant dense<0.000000e+00> : vector<8x512xf32>
    %115 = tpu.matmul %89, %114, %cst_54 {dimension_numbers = #tpu.dot_dimension_numbers<[1], [0], [0], [1], [0, 0, 1, 1], [], []>} : vector<8x72xf32>, vector<72x512xf32>, vector<8x512xf32> -> vector<8x512xf32>
    %c0_55 = arith.constant 0 : index
    %c0_56 = arith.constant 0 : index
    %116 = vector.load %arg7[%c0_55, %c0_56] : memref<8x1xf32, #tpu.memory_space<vmem>>, vector<8x1xf32>
    %117 = vector.broadcast %116 : vector<8x1xf32> to vector<8x512xf32>
    %118 = arith.addf %115, %117 : vector<8x512xf32>
    %c0_57 = arith.constant 0 : index
    %c0_58 = arith.constant 0 : index
    %119 = vector.load %arg8[%c0_57, %c0_58] : memref<8x1xf32, #tpu.memory_space<vmem>>, vector<8x1xf32>
    %c0_59 = arith.constant 0 : index
    %c0_60 = arith.constant 0 : index
    %120 = vector.load %arg9[%c0_59, %c0_60] : memref<8x1xf32, #tpu.memory_space<vmem>>, vector<8x1xf32>
    %cst_61 = arith.constant dense<0.000000e+00> : vector<8xf32>
    %121 = vector.multi_reduction <add>, %118, %cst_61 [1] : vector<8x512xf32> to vector<8xf32>
    %122 = vector.shape_cast %121 : vector<8xf32> to vector<8x1xf32>
    %cst_62 = arith.constant 0.001953125 : f32
    %123 = vector.broadcast %cst_62 : f32 to vector<8x1xf32>
    %124 = arith.mulf %122, %123 : vector<8x1xf32>
    %125 = vector.broadcast %124 : vector<8x1xf32> to vector<8x512xf32>
    %126 = arith.subf %118, %125 : vector<8x512xf32>
    %127 = arith.mulf %126, %126 : vector<8x512xf32>
    %cst_63 = arith.constant dense<0.000000e+00> : vector<8xf32>
    %128 = vector.multi_reduction <add>, %127, %cst_63 [1] : vector<8x512xf32> to vector<8xf32>
    %129 = vector.shape_cast %128 : vector<8xf32> to vector<8x1xf32>
    %cst_64 = arith.constant 0.001953125 : f32
    %130 = vector.broadcast %cst_64 : f32 to vector<8x1xf32>
    %131 = arith.mulf %129, %130 : vector<8x1xf32>
    %cst_65 = arith.constant 9.99999974E-6 : f32
    %132 = vector.broadcast %cst_65 : f32 to vector<8x1xf32>
    %133 = arith.addf %131, %132 : vector<8x1xf32>
    %134 = math.rsqrt %133 : vector<8x1xf32>
    %135 = arith.mulf %119, %134 : vector<8x1xf32>
    %136 = vector.broadcast %135 : vector<8x1xf32> to vector<8x512xf32>
    %137 = arith.mulf %126, %136 : vector<8x512xf32>
    %138 = vector.broadcast %120 : vector<8x1xf32> to vector<8x512xf32>
    %139 = arith.addf %137, %138 : vector<8x512xf32>
    %cst_66 = arith.constant 0.000000e+00 : f32
    %140 = vector.broadcast %cst_66 : f32 to vector<8x512xf32>
    %141 = arith.maximumf %139, %140 : vector<8x512xf32>
    %c0_67 = arith.constant 0 : index
    %c0_68 = arith.constant 0 : index
    %142 = vector.load %arg10[%c0_67, %c0_68] : memref<8x512xf32, #tpu.memory_space<vmem>>, vector<8x512xf32>
    tpu.vector_store %arg10[%c0_67, %c0_68], %141 {strides = array<i32>} : memref<8x512xf32, #tpu.memory_space<vmem>>, vector<8x512xf32>,
    return
  }
  func.func @transform_0(%arg0: i32) -> (i32, i32) {
    %c0_i32 = arith.constant 0 : i32
    %c0_i32_0 = arith.constant 0 : i32
    %c0_i32_1 = arith.constant 0 : i32
    return %c0_i32, %c0_i32_0 : i32, i32
  }
  func.func @transform_1(%arg0: i32) -> (i32, i32) {
    %c0_i32 = arith.constant 0 : i32
    %c0_i32_0 = arith.constant 0 : i32
    %c0_i32_1 = arith.constant 0 : i32
    return %c0_i32, %c0_i32_0 : i32, i32
  }
  func.func @transform_2(%arg0: i32) -> (i32, i32) {
    %c0_i32 = arith.constant 0 : i32
    %c0_i32_0 = arith.constant 0 : i32
    %c0_i32_1 = arith.constant 0 : i32
    return %c0_i32, %c0_i32_0 : i32, i32
  }
  func.func @transform_3(%arg0: i32) -> (i32, i32) {
    %c0_i32 = arith.constant 0 : i32
    %c0_i32_0 = arith.constant 0 : i32
    %c0_i32_1 = arith.constant 0 : i32
    return %c0_i32, %c0_i32_0 : i32, i32
  }
  func.func @transform_4(%arg0: i32) -> (i32, i32) {
    %c0_i32 = arith.constant 0 : i32
    %c0_i32_0 = arith.constant 0 : i32
    %c0_i32_1 = arith.constant 0 : i32
    return %c0_i32, %c0_i32_0 : i32, i32
  }
  func.func @transform_5(%arg0: i32) -> (i32, i32) {
    %c0_i32 = arith.constant 0 : i32
    %c0_i32_0 = arith.constant 0 : i32
    %c0_i32_1 = arith.constant 0 : i32
    return %c0_i32, %c0_i32_0 : i32, i32
  }
  func.func @transform_6(%arg0: i32) -> (i32, i32) {
    %c0_i32 = arith.constant 0 : i32
    %c0_i32_0 = arith.constant 0 : i32
    %c0_i32_1 = arith.constant 0 : i32
    return %c0_i32, %c0_i32_0 : i32, i32
  }
  func.func @transform_7(%arg0: i32) -> (i32, i32) {
    %c0_i32 = arith.constant 0 : i32
    %c0_i32_0 = arith.constant 0 : i32
    %c0_i32_1 = arith.constant 0 : i32
    return %c0_i32, %c0_i32_0 : i32, i32
  }
  func.func @transform_8(%arg0: i32) -> (i32, i32) {
    %c0_i32 = arith.constant 0 : i32
    %c0_i32_0 = arith.constant 0 : i32
    %c0_i32_1 = arith.constant 0 : i32
    return %c0_i32, %c0_i32_0 : i32, i32
  }
  func.func @transform_9(%arg0: i32) -> (i32, i32) {
    %c0_i32 = arith.constant 0 : i32
    %c0_i32_0 = arith.constant 0 : i32
    %c0_i32_1 = arith.constant 0 : i32
    return %c0_i32, %c0_i32_0 : i32, i32
  }
}

</mosaic_0001>

<llo_original>
// kernel: basic_conv_block_forward.1
$region0: #{basic_conv_block_forward.1}
  #allocation0 [shape = 'u32[]', space=smem, size = 0x4, offset = 0x4, fixed_abs, tag = 'smem constant byte address 0x4 - core index']
  #allocation1 [shape = 'u32[72,128]{1,0:T(1,128)}', space=vmem, size = 0x9000, scoped, tag = 'internal scratch']
  %s0 = inlined_call_operand.vmem [shape: f32[8,512], index: 0, kind: input, shape index: {}]
  %s1 = inlined_call_operand.vmem [shape: f32[8,72], index: 1, kind: input, shape index: {}]
  %s2 = inlined_call_operand.vmem [shape: f32[8,1], index: 2, kind: input, shape index: {}]
  %s3 = inlined_call_operand.vmem [shape: f32[8,1], index: 3, kind: input, shape index: {}]
  %s4 = inlined_call_operand.vmem [shape: f32[8,1], index: 4, kind: input, shape index: {}]
  %s5 = inlined_call_operand.vmem [shape: f32[8,72], index: 5, kind: input, shape index: {}]
  %s6 = inlined_call_operand.vmem [shape: f32[8,1], index: 6, kind: input, shape index: {}]
  %s7 = inlined_call_operand.vmem [shape: f32[8,1], index: 7, kind: input, shape index: {}]
  %s8 = inlined_call_operand.vmem [shape: f32[8,1], index: 8, kind: input, shape index: {}]
  %s9 = inlined_call_operand.vmem [shape: f32[8,512], index: 9, kind: output, shape index: {}]
  %s10 = sld [smem:[#allocation0]]
  $region46: #{basic_conv_block_forward.1} parent=0
    _
  %s12 = ssub.s32 1, %s10
  %s13 = scalar_select 0, %s12, %s10
  // Predicated region
  $region2: #{basic_conv_block_forward.1} parent=0 // pred_check
    _
  $region3: #{basic_conv_block_forward.1} parent=0 // pred_check_branch
    %15 = sbr.rel (0) target = $region5
  $region4: #{basic_conv_block_forward.1} parent=0 // pred_region
    _
  $region5: #{basic_conv_block_forward.1} parent=0 // pred_fallthru
    _
  // Predicated region
  $region6: #{basic_conv_block_forward.1} parent=0 // pred_check
    _
  $region7: #{basic_conv_block_forward.1} parent=0 // pred_check_branch
    %17 = sbr.rel (0) target = $region9
  $region8: #{basic_conv_block_forward.1} parent=0 // pred_region
    _
  $region9: #{basic_conv_block_forward.1} parent=0 // pred_fallthru
    _
  // Predicated region
  $region10: #{basic_conv_block_forward.1} parent=0 // pred_check
    _
  $region11: #{basic_conv_block_forward.1} parent=0 // pred_check_branch
    %19 = sbr.rel (0) target = $region13
  $region12: #{basic_conv_block_forward.1} parent=0 // pred_region
    _
  $region13: #{basic_conv_block_forward.1} parent=0 // pred_fallthru
    _
  // Predicated region
  $region14: #{basic_conv_block_forward.1} parent=0 // pred_check
    _
  $region15: #{basic_conv_block_forward.1} parent=0 // pred_check_branch
    %21 = sbr.rel (0) target = $region17
  $region16: #{basic_conv_block_forward.1} parent=0 // pred_region
    _
  $region17: #{basic_conv_block_forward.1} parent=0 // pred_fallthru
    _
  // Predicated region
  $region18: #{basic_conv_block_forward.1} parent=0 // pred_check
    _
  $region19: #{basic_conv_block_forward.1} parent=0 // pred_check_branch
    %23 = sbr.rel (0) target = $region21
  $region20: #{basic_conv_block_forward.1} parent=0 // pred_region
    _
  $region21: #{basic_conv_block_forward.1} parent=0 // pred_fallthru
    _
  // Predicated region
  $region22: #{basic_conv_block_forward.1} parent=0 // pred_check
    _
  $region23: #{basic_conv_block_forward.1} parent=0 // pred_check_branch
    %25 = sbr.rel (0) target = $region25
  $region24: #{basic_conv_block_forward.1} parent=0 // pred_region
    _
  $region25: #{basic_conv_block_forward.1} parent=0 // pred_fallthru
    _
  // Predicated region
  $region26: #{basic_conv_block_forward.1} parent=0 // pred_check
    _
  $region27: #{basic_conv_block_forward.1} parent=0 // pred_check_branch
    %27 = sbr.rel (0) target = $region29
  $region28: #{basic_conv_block_forward.1} parent=0 // pred_region
    _
  $region29: #{basic_conv_block_forward.1} parent=0 // pred_fallthru
    _
  // Predicated region
  $region30: #{basic_conv_block_forward.1} parent=0 // pred_check
    _
  $region31: #{basic_conv_block_forward.1} parent=0 // pred_check_branch
    %29 = sbr.rel (0) target = $region33
  $region32: #{basic_conv_block_forward.1} parent=0 // pred_region
    _
  $region33: #{basic_conv_block_forward.1} parent=0 // pred_fallthru
    _
  // Predicated region
  $region34: #{basic_conv_block_forward.1} parent=0 // pred_check
    _
  $region35: #{basic_conv_block_forward.1} parent=0 // pred_check_branch
    %31 = sbr.rel (0) target = $region37
  $region36: #{basic_conv_block_forward.1} parent=0 // pred_region
    _
  $region37: #{basic_conv_block_forward.1} parent=0 // pred_fallthru
    _
  %v32 = vld [vmem:[%s1] sm:$0xff]
  %v33 = vld [vmem:[%s0] sm:$0xff]
  %v34 = vld [vmem:[%s0 + $0x8] sm:$0xff]
  %v35 = vld [vmem:[%s0 + $0x10] sm:$0xff]
  %v36 = vld [vmem:[%s0 + $0x18] sm:$0xff]
  %v37 = vlaneseq
  %v38 = vand.u32 %v37, 127
  %v39 = vadd.s32 %v38, 128
  %v40 = vadd.s32 %v38, 256
  %v41 = vadd.s32 %v38, 384
  %v42 = vand.u32 %v38, 255
  %v43 = vand.u32 %v39, 255
  %v44 = vand.u32 %v40, 255
  %v45 = vand.u32 %v41, 255
  %v46 = vshra.s32 %v42, 4
  %v47 = vshra.s32 %v43, 4
  %v48 = vshra.s32 %v44, 4
  %v49 = vshra.s32 %v45, 4
  %v50 = vand.u32 %v42, 15
  %v51 = vand.u32 %v43, 15
  %v52 = vand.u32 %v44, 15
  %v53 = vand.u32 %v45, 15
  %vm54 = vcmp.ge.s32.totalorder %v46, 1
  %vm55 = vcmp.ge.s32.totalorder %v47, 1
  %vm56 = vcmp.ge.s32.totalorder %v48, 1
  %vm57 = vcmp.ge.s32.totalorder %v49, 1
  %vm58 = vcmp.ge.s32.totalorder %v50, 1
  %vm59 = vcmp.ge.s32.totalorder %v51, 1
  %vm60 = vcmp.ge.s32.totalorder %v52, 1
  %vm61 = vcmp.ge.s32.totalorder %v53, 1
  %vm62 = vmand %vm54, %vm58
  %vm63 = vmand %vm55, %vm59
  %vm64 = vmand %vm56, %vm60
  %vm65 = vmand %vm57, %vm61
  %vm66 = vcmp.lt.s32.totalorder %v50, 15
  %vm67 = vcmp.lt.s32.totalorder %v51, 15
  %vm68 = vcmp.lt.s32.totalorder %v52, 15
  %vm69 = vcmp.lt.s32.totalorder %v53, 15
  %vm70 = vmand %vm54, %vm66
  %vm71 = vmand %vm55, %vm67
  %vm72 = vmand %vm56, %vm68
  %vm73 = vmand %vm57, %vm69
  %vm74 = vcmp.lt.s32.totalorder %v46, 15
  %vm75 = vcmp.lt.s32.totalorder %v47, 15
  %vm76 = vcmp.lt.s32.totalorder %v48, 15
  %vm77 = vcmp.lt.s32.totalorder %v49, 15
  %vm78 = vmand %vm74, %vm58
  %vm79 = vmand %vm75, %vm59
  %vm80 = vmand %vm76, %vm60
  %vm81 = vmand %vm77, %vm61
  %vm82 = vmand %vm74, %vm66
  %vm83 = vmand %vm75, %vm67
  %vm84 = vmand %vm76, %vm68
  %vm85 = vmand %vm77, %vm69
  %86 = vrot.lane.b32.xlu0 %v33, 17
  %v87 = vpop.permute.xlu0 %86
  %88 = vrot.lane.b32.xlu0 %v34, 17
  %v89 = vpop.permute.xlu0 %88
  %90 = vrot.lane.b32.xlu0 %v35, 17
  %v91 = vpop.permute.xlu0 %90
  %92 = vrot.lane.b32.xlu0 %v36, 17
  %v93 = vpop.permute.xlu0 %92
  %vm94 = vcmp.lt.s32.totalorder %v38, 17
  %v95 = vsel %vm94, %v91, %v93
  %v96 = vsel %vm94, %v89, %v91
  %v97 = vsel %vm94, %v87, %v89
  %v98 = vsel %vm94, %v93, %v87
  %v99 = vsel %vm62, %v98, 0.0
  %v100 = vsel %vm63, %v97, 0.0
  %v101 = vsel %vm64, %v96, 0.0
  %v102 = vsel %vm65, %v95, 0.0
  %103 = vrot.lane.b32.xlu0 %v33, 16
  %v104 = vpop.permute.xlu0 %103
  %105 = vrot.lane.b32.xlu0 %v34, 16
  %v106 = vpop.permute.xlu0 %105
  %107 = vrot.lane.b32.xlu0 %v35, 16
  %v108 = vpop.permute.xlu0 %107
  %109 = vrot.lane.b32.xlu0 %v36, 16
  %v110 = vpop.permute.xlu0 %109
  %vm111 = vcmp.lt.s32.totalorder %v38, 16
  %v112 = vsel %vm111, %v108, %v110
  %v113 = vsel %vm111, %v106, %v108
  %v114 = vsel %vm111, %v104, %v106
  %v115 = vsel %vm111, %v110, %v104
  %v116 = vsel %vm54, %v115, 0.0
  %v117 = vsel %vm55, %v114, 0.0
  %v118 = vsel %vm56, %v113, 0.0
  %v119 = vsel %vm57, %v112, 0.0
  %120 = vrot.lane.b32.xlu0 %v33, 15
  %v121 = vpop.permute.xlu0 %120
  %122 = vrot.lane.b32.xlu0 %v34, 15
  %v123 = vpop.permute.xlu0 %122
  %124 = vrot.lane.b32.xlu0 %v35, 15
  %v125 = vpop.permute.xlu0 %124
  %126 = vrot.lane.b32.xlu0 %v36, 15
  %v127 = vpop.permute.xlu0 %126
  %vm128 = vcmp.lt.s32.totalorder %v38, 15
  %v129 = vsel %vm128, %v125, %v127
  %v130 = vsel %vm128, %v123, %v125
  %v131 = vsel %vm128, %v121, %v123
  %v132 = vsel %vm128, %v127, %v121
  %v133 = vsel %vm70, %v132, 0.0
  %v134 = vsel %vm71, %v131, 0.0
  %v135 = vsel %vm72, %v130, 0.0
  %v136 = vsel %vm73, %v129, 0.0
  %137 = vrot.lane.b32.xlu0 %v33, 1
  %v138 = vpop.permute.xlu0 %137
  %139 = vrot.lane.b32.xlu0 %v34, 1
  %v140 = vpop.permute.xlu0 %139
  %141 = vrot.lane.b32.xlu0 %v35, 1
  %v142 = vpop.permute.xlu0 %141
  %143 = vrot.lane.b32.xlu0 %v36, 1
  %v144 = vpop.permute.xlu0 %143
  %vm145 = vcmp.lt.s32.totalorder %v38, 1
  %v146 = vsel %vm145, %v142, %v144
  %v147 = vsel %vm145, %v140, %v142
  %v148 = vsel %vm145, %v138, %v140
  %v149 = vsel %vm145, %v144, %v138
  %v150 = vsel %vm58, %v149, 0.0
  %v151 = vsel %vm59, %v148, 0.0
  %v152 = vsel %vm60, %v147, 0.0
  %v153 = vsel %vm61, %v146, 0.0
  %154 = vrot.lane.b32.xlu0 %v33, 127
  %v155 = vpop.permute.xlu0 %154
  %156 = vrot.lane.b32.xlu0 %v34, 127
  %v157 = vpop.permute.xlu0 %156
  %158 = vrot.lane.b32.xlu0 %v35, 127
  %v159 = vpop.permute.xlu0 %158
  %160 = vrot.lane.b32.xlu0 %v36, 127
  %v161 = vpop.permute.xlu0 %160
  %vm162 = vcmp.lt.s32.totalorder %v38, 127
  %v163 = vsel %vm162, %v159, %v161
  %v164 = vsel %vm162, %v157, %v159
  %v165 = vsel %vm162, %v155, %v157
  %v166 = vsel %vm162, %v161, %v155
  %v167 = vsel %vm66, %v165, 0.0
  %v168 = vsel %vm67, %v164, 0.0
  %v169 = vsel %vm68, %v163, 0.0
  %v170 = vsel %vm69, %v166, 0.0
  %171 = vrot.lane.b32.xlu0 %v33, 113
  %v172 = vpop.permute.xlu0 %171
  %173 = vrot.lane.b32.xlu0 %v34, 113
  %v174 = vpop.permute.xlu0 %173
  %175 = vrot.lane.b32.xlu0 %v35, 113
  %v176 = vpop.permute.xlu0 %175
  %177 = vrot.lane.b32.xlu0 %v36, 113
  %v178 = vpop.permute.xlu0 %177
  %vm179 = vcmp.lt.s32.totalorder %v38, 113
  %v180 = vsel %vm179, %v176, %v178
  %v181 = vsel %vm179, %v174, %v176
  %v182 = vsel %vm179, %v172, %v174
  %v183 = vsel %vm179, %v178, %v172
  %v184 = vsel %vm78, %v182, 0.0
  %v185 = vsel %vm79, %v181, 0.0
  %v186 = vsel %vm80, %v180, 0.0
  %v187 = vsel %vm81, %v183, 0.0
  %188 = vrot.lane.b32.xlu0 %v33, 112
  %v189 = vpop.permute.xlu0 %188
  %190 = vrot.lane.b32.xlu0 %v34, 112
  %v191 = vpop.permute.xlu0 %190
  %192 = vrot.lane.b32.xlu0 %v35, 112
  %v193 = vpop.permute.xlu0 %192
  %194 = vrot.lane.b32.xlu0 %v36, 112
  %v195 = vpop.permute.xlu0 %194
  %vm196 = vcmp.lt.s32.totalorder %v38, 112
  %v197 = vsel %vm196, %v193, %v195
  %v198 = vsel %vm196, %v191, %v193
  %v199 = vsel %vm196, %v189, %v191
  %v200 = vsel %vm196, %v195, %v189
  %v201 = vsel %vm74, %v199, 0.0
  %v202 = vsel %vm75, %v198, 0.0
  %v203 = vsel %vm76, %v197, 0.0
  %v204 = vsel %vm77, %v200, 0.0
  %205 = vrot.lane.b32.xlu0 %v33, 111
  %v206 = vpop.permute.xlu0 %205
  %207 = vrot.lane.b32.xlu0 %v34, 111
  %v208 = vpop.permute.xlu0 %207
  %209 = vrot.lane.b32.xlu0 %v35, 111
  %v210 = vpop.permute.xlu0 %209
  %211 = vrot.lane.b32.xlu0 %v36, 111
  %v212 = vpop.permute.xlu0 %211
  %vm213 = vcmp.lt.s32.totalorder %v38, 111
  %v214 = vsel %vm213, %v210, %v212
  %v215 = vsel %vm213, %v208, %v210
  %v216 = vsel %vm213, %v206, %v208
  %v217 = vsel %vm213, %v212, %v206
  %v218 = vsel %vm82, %v216, 0.0
  %v219 = vsel %vm83, %v215, 0.0
  %v220 = vsel %vm84, %v214, 0.0
  %v221 = vsel %vm85, %v217, 0.0
  %v222 = vld [vmem:[%s2] sm:$0xff]
  %224 = vset.pattern.permute.xlu0 0
  %225 = vperm.xlu0 %224, %v222
  %v226 = vpop.permute.xlu0 %225
  %vm228 = vcmask 588800
  %v230 = vsel %vm228, %v32, 0
  %232 = vmatpush.msra.mxu0 0.0
  %233 = vmatpush.msra.mxu0 0.0
  %234 = vmatpush.msra.mxu0 0.0
  %235 = vmatpush.msra.mxu0 0.0
  %236 = vmatpush.msra.mxu0 0.0
  %237 = vmatpush.msra.mxu0 0.0
  %238 = vmatpush.msra.mxu0 0.0
  %239 = vmatpush.msra.mxu0 %v218
  %240 = vmatpush.msra.mxu0 %v201
  %241 = vmatpush.msra.mxu0 %v184
  %242 = vmatpush.msra.mxu0 %v167
  %243 = vmatpush.msra.mxu0 %v33
  %244 = vmatpush.msra.mxu0 %v150
  %245 = vmatpush.msra.mxu0 %v133
  %246 = vmatpush.msra.mxu0 %v116
  %247 = vmatpush.msra.mxu0 %v99
  %248 = vmatmul.f32.gmra.mxu0 %v230
  %v249 = vpop.f32.mrf.mxu0
  %v250 = vadd.f32 %v226, %v249
  %251 = vdwg.mxu0
  %252 = vmatpush.msra.mxu0 0.0
  %253 = vmatpush.msra.mxu0 0.0
  %254 = vmatpush.msra.mxu0 0.0
  %255 = vmatpush.msra.mxu0 0.0
  %256 = vmatpush.msra.mxu0 0.0
  %257 = vmatpush.msra.mxu0 0.0
  %258 = vmatpush.msra.mxu0 0.0
  %259 = vmatpush.msra.mxu0 %v219
  %260 = vmatpush.msra.mxu0 %v202
  %261 = vmatpush.msra.mxu0 %v185
  %262 = vmatpush.msra.mxu0 %v168
  %263 = vmatpush.msra.mxu0 %v34
  %264 = vmatpush.msra.mxu0 %v151
  %265 = vmatpush.msra.mxu0 %v134
  %266 = vmatpush.msra.mxu0 %v117
  %267 = vmatpush.msra.mxu0 %v100
  %268 = vmatmul.f32.gmra.mxu0 %v230
  %v269 = vpop.f32.mrf.mxu0
  %v270 = vadd.f32 %v226, %v269
  %271 = vdwg.mxu0
  %272 = vmatpush.msra.mxu0 0.0
  %273 = vmatpush.msra.mxu0 0.0
  %274 = vmatpush.msra.mxu0 0.0
  %275 = vmatpush.msra.mxu0 0.0
  %276 = vmatpush.msra.mxu0 0.0
  %277 = vmatpush.msra.mxu0 0.0
  %278 = vmatpush.msra.mxu0 0.0
  %279 = vmatpush.msra.mxu0 %v220
  %280 = vmatpush.msra.mxu0 %v203
  %281 = vmatpush.msra.mxu0 %v186
  %282 = vmatpush.msra.mxu0 %v169
  %283 = vmatpush.msra.mxu0 %v35
  %284 = vmatpush.msra.mxu0 %v152
  %285 = vmatpush.msra.mxu0 %v135
  %286 = vmatpush.msra.mxu0 %v118
  %287 = vmatpush.msra.mxu0 %v101
  %288 = vmatmul.f32.gmra.mxu0 %v230
  %v289 = vpop.f32.mrf.mxu0
  %v290 = vadd.f32 %v226, %v289
  %291 = vdwg.mxu0
  %292 = vmatpush.msra.mxu0 0.0
  %293 = vmatpush.msra.mxu0 0.0
  %294 = vmatpush.msra.mxu0 0.0
  %295 = vmatpush.msra.mxu0 0.0
  %296 = vmatpush.msra.mxu0 0.0
  %297 = vmatpush.msra.mxu0 0.0
  %298 = vmatpush.msra.mxu0 0.0
  %299 = vmatpush.msra.mxu0 %v221
  %300 = vmatpush.msra.mxu0 %v204
  %301 = vmatpush.msra.mxu0 %v187
  %302 = vmatpush.msra.mxu0 %v170
  %303 = vmatpush.msra.mxu0 %v36
  %304 = vmatpush.msra.mxu0 %v153
  %305 = vmatpush.msra.mxu0 %v136
  %306 = vmatpush.msra.mxu0 %v119
  %307 = vmatpush.msra.mxu0 %v102
  %308 = vmatmul.f32.gmra.mxu0 %v230
  %v309 = vpop.f32.mrf.mxu0
  %v310 = vadd.f32 %v226, %v309
  %311 = vdwg.mxu0
  %v312 = vld [vmem:[%s3] sm:$0xff]
  %v313 = vld [vmem:[%s4] sm:$0xff]
  %v314 = vadd.f32 %v250, %v270
  %v315 = vadd.f32 %v314, %v290
  %v316 = vadd.f32 %v315, %v310
  %317 = vadd.xlane.f32.xlu0 %v316
  %v318 = vpop.xlane.xlu0 %317
  %v319 = vmul.f32 %v318, 0.001953125
  %v320 = vsub.f32 %v250, %v319
  %v321 = vsub.f32 %v270, %v319
  %v322 = vsub.f32 %v290, %v319
  %v323 = vsub.f32 %v310, %v319
  %v324 = vmul.f32 %v320, %v320
  %v325 = vmul.f32 %v321, %v321
  %v326 = vmul.f32 %v322, %v322
  %v327 = vmul.f32 %v323, %v323
  %v328 = vadd.f32 %v324, %v325
  %v329 = vadd.f32 %v328, %v326
  %v330 = vadd.f32 %v329, %v327
  %331 = vadd.xlane.f32.xlu0 %v330
  %v332 = vpop.xlane.xlu0 %331
  %v333 = vmul.f32 %v332, 0.001953125
  %v334 = vadd.f32 %v333, 1e-05
  %v335 = vrsqrt.pop %v334
  %v336 = vmul.f32 %v335, %v334
  %v337 = vmul.f32 %v336, %v335
  %v338 = vmul.f32 0.5, %v337
  %v339 = vsub.f32 1.5, %v338
  %v340 = vmul.f32 %v335, %v339
  %vm341 = vweird.f32 %v334
  %vm342 = vweird.f32 %v335
  %vm343 = vmor %vm341, %vm342
  %v344 = vsel %vm343, %v335, %v340
  %v345 = vmul.f32 %v312, %v344
  %347 = vset.pattern.permute.xlu0 0
  %348 = vperm.xlu0 %347, %v345
  %v349 = vpop.permute.xlu0 %348
  %v351 = vmul.f32 %v320, %v349
  %v352 = vmul.f32 %v321, %v349
  %v353 = vmul.f32 %v322, %v349
  %v354 = vmul.f32 %v323, %v349
  %356 = vset.pattern.permute.xlu0 0
  %357 = vperm.xlu0 %356, %v313
  %v358 = vpop.permute.xlu0 %357
  %v360 = vadd.f32 %v351, %v358
  %v361 = vadd.f32 %v352, %v358
  %v362 = vadd.f32 %v353, %v358
  %v363 = vadd.f32 %v354, %v358
  %v364 = vmax.f32 %v360, 0.0
  %v365 = vmax.f32 %v361, 0.0
  %v366 = vmax.f32 %v362, 0.0
  %v367 = vmax.f32 %v363, 0.0
  %v368 = vld [vmem:[%s5] sm:$0xff]
  %369 = vrot.lane.b32.xlu0 %v364, 17
  %v370 = vpop.permute.xlu0 %369
  %371 = vrot.lane.b32.xlu0 %v365, 17
  %v372 = vpop.permute.xlu0 %371
  %373 = vrot.lane.b32.xlu0 %v366, 17
  %v374 = vpop.permute.xlu0 %373
  %375 = vrot.lane.b32.xlu0 %v367, 17
  %v376 = vpop.permute.xlu0 %375
  %v377 = vsel %vm94, %v374, %v376
  %v378 = vsel %vm94, %v372, %v374
  %v379 = vsel %vm94, %v370, %v372
  %v380 = vsel %vm94, %v376, %v370
  %v381 = vsel %vm62, %v380, 0.0
  %v382 = vsel %vm63, %v379, 0.0
  %v383 = vsel %vm64, %v378, 0.0
  %v384 = vsel %vm65, %v377, 0.0
  %385 = vrot.lane.b32.xlu0 %v364, 16
  %v386 = vpop.permute.xlu0 %385
  %387 = vrot.lane.b32.xlu0 %v365, 16
  %v388 = vpop.permute.xlu0 %387
  %389 = vrot.lane.b32.xlu0 %v366, 16
  %v390 = vpop.permute.xlu0 %389
  %391 = vrot.lane.b32.xlu0 %v367, 16
  %v392 = vpop.permute.xlu0 %391
  %v393 = vsel %vm111, %v390, %v392
  %v394 = vsel %vm111, %v388, %v390
  %v395 = vsel %vm111, %v386, %v388
  %v396 = vsel %vm111, %v392, %v386
  %v397 = vsel %vm54, %v396, 0.0
  %v398 = vsel %vm55, %v395, 0.0
  %v399 = vsel %vm56, %v394, 0.0
  %v400 = vsel %vm57, %v393, 0.0
  %401 = vrot.lane.b32.xlu0 %v364, 15
  %v402 = vpop.permute.xlu0 %401
  %403 = vrot.lane.b32.xlu0 %v365, 15
  %v404 = vpop.permute.xlu0 %403
  %405 = vrot.lane.b32.xlu0 %v366, 15
  %v406 = vpop.permute.xlu0 %405
  %407 = vrot.lane.b32.xlu0 %v367, 15
  %v408 = vpop.permute.xlu0 %407
  %v409 = vsel %vm128, %v406, %v408
  %v410 = vsel %vm128, %v404, %v406
  %v411 = vsel %vm128, %v402, %v404
  %v412 = vsel %vm128, %v408, %v402
  %v413 = vsel %vm70, %v412, 0.0
  %v414 = vsel %vm71, %v411, 0.0
  %v415 = vsel %vm72, %v410, 0.0
  %v416 = vsel %vm73, %v409, 0.0
  %417 = vrot.lane.b32.xlu0 %v364, 1
  %v418 = vpop.permute.xlu0 %417
  %419 = vrot.lane.b32.xlu0 %v365, 1
  %v420 = vpop.permute.xlu0 %419
  %421 = vrot.lane.b32.xlu0 %v366, 1
  %v422 = vpop.permute.xlu0 %421
  %423 = vrot.lane.b32.xlu0 %v367, 1
  %v424 = vpop.permute.xlu0 %423
  %v425 = vsel %vm145, %v422, %v424
  %v426 = vsel %vm145, %v420, %v422
  %v427 = vsel %vm145, %v418, %v420
  %v428 = vsel %vm145, %v424, %v418
  %v429 = vsel %vm58, %v428, 0.0
  %v430 = vsel %vm59, %v427, 0.0
  %v431 = vsel %vm60, %v426, 0.0
  %v432 = vsel %vm61, %v425, 0.0
  %433 = vrot.lane.b32.xlu0 %v364, 127
  %v434 = vpop.permute.xlu0 %433
  %435 = vrot.lane.b32.xlu0 %v365, 127
  %v436 = vpop.permute.xlu0 %435
  %437 = vrot.lane.b32.xlu0 %v366, 127
  %v438 = vpop.permute.xlu0 %437
  %439 = vrot.lane.b32.xlu0 %v367, 127
  %v440 = vpop.permute.xlu0 %439
  %v441 = vsel %vm162, %v438, %v440
  %v442 = vsel %vm162, %v436, %v438
  %v443 = vsel %vm162, %v434, %v436
  %v444 = vsel %vm162, %v440, %v434
  %v445 = vsel %vm66, %v443, 0.0
  %v446 = vsel %vm67, %v442, 0.0
  %v447 = vsel %vm68, %v441, 0.0
  %v448 = vsel %vm69, %v444, 0.0
  %449 = vrot.lane.b32.xlu0 %v364, 113
  %v450 = vpop.permute.xlu0 %449
  %451 = vrot.lane.b32.xlu0 %v365, 113
  %v452 = vpop.permute.xlu0 %451
  %453 = vrot.lane.b32.xlu0 %v366, 113
  %v454 = vpop.permute.xlu0 %453
  %455 = vrot.lane.b32.xlu0 %v367, 113
  %v456 = vpop.permute.xlu0 %455
  %v457 = vsel %vm179, %v454, %v456
  %v458 = vsel %vm179, %v452, %v454
  %v459 = vsel %vm179, %v450, %v452
  %v460 = vsel %vm179, %v456, %v450
  %v461 = vsel %vm78, %v459, 0.0
  %v462 = vsel %vm79, %v458, 0.0
  %v463 = vsel %vm80, %v457, 0.0
  %v464 = vsel %vm81, %v460, 0.0
  %465 = vrot.lane.b32.xlu0 %v364, 112
  %v466 = vpop.permute.xlu0 %465
  %467 = vrot.lane.b32.xlu0 %v365, 112
  %v468 = vpop.permute.xlu0 %467
  %469 = vrot.lane.b32.xlu0 %v366, 112
  %v470 = vpop.permute.xlu0 %469
  %471 = vrot.lane.b32.xlu0 %v367, 112
  %v472 = vpop.permute.xlu0 %471
  %v473 = vsel %vm196, %v470, %v472
  %v474 = vsel %vm196, %v468, %v470
  %v475 = vsel %vm196, %v466, %v468
  %v476 = vsel %vm196, %v472, %v466
  %v477 = vsel %vm74, %v475, 0.0
  %v478 = vsel %vm75, %v474, 0.0
  %v479 = vsel %vm76, %v473, 0.0
  %v480 = vsel %vm77, %v476, 0.0
  %481 = vrot.lane.b32.xlu0 %v364, 111
  %v482 = vpop.permute.xlu0 %481
  %483 = vrot.lane.b32.xlu0 %v365, 111
  %v484 = vpop.permute.xlu0 %483
  %485 = vrot.lane.b32.xlu0 %v366, 111
  %v486 = vpop.permute.xlu0 %485
  %487 = vrot.lane.b32.xlu0 %v367, 111
  %v488 = vpop.permute.xlu0 %487
  %v489 = vsel %vm213, %v486, %v488
  %v490 = vsel %vm213, %v484, %v486
  %v491 = vsel %vm213, %v482, %v484
  %v492 = vsel %vm213, %v488, %v482
  %v493 = vsel %vm82, %v491, 0.0
  %v494 = vsel %vm83, %v490, 0.0
  %v495 = vsel %vm84, %v489, 0.0
  %v496 = vsel %vm85, %v492, 0.0
  %v497 = vld [vmem:[%s6] sm:$0xff]
  %499 = vset.pattern.permute.xlu0 0
  %500 = vperm.xlu0 %499, %v497
  %v501 = vpop.permute.xlu0 %500
  %v504 = vsel %vm228, %v368, 0
  %506 = vmatpush.msra.mxu0 0.0
  %507 = vmatpush.msra.mxu0 0.0
  %508 = vmatpush.msra.mxu0 0.0
  %509 = vmatpush.msra.mxu0 0.0
  %510 = vmatpush.msra.mxu0 0.0
  %511 = vmatpush.msra.mxu0 0.0
  %512 = vmatpush.msra.mxu0 0.0
  %513 = vmatpush.msra.mxu0 %v493
  %514 = vmatpush.msra.mxu0 %v477
  %515 = vmatpush.msra.mxu0 %v461
  %516 = vmatpush.msra.mxu0 %v445
  %517 = vmatpush.msra.mxu0 %v364
  %518 = vmatpush.msra.mxu0 %v429
  %519 = vmatpush.msra.mxu0 %v413
  %520 = vmatpush.msra.mxu0 %v397
  %521 = vmatpush.msra.mxu0 %v381
  %522 = vmatmul.f32.gmra.mxu0 %v504
  %v523 = vpop.f32.mrf.mxu0
  %v524 = vadd.f32 %v501, %v523
  %525 = vdwg.mxu0
  %526 = vmatpush.msra.mxu0 0.0
  %527 = vmatpush.msra.mxu0 0.0
  %528 = vmatpush.msra.mxu0 0.0
  %529 = vmatpush.msra.mxu0 0.0
  %530 = vmatpush.msra.mxu0 0.0
  %531 = vmatpush.msra.mxu0 0.0
  %532 = vmatpush.msra.mxu0 0.0
  %533 = vmatpush.msra.mxu0 %v494
  %534 = vmatpush.msra.mxu0 %v478
  %535 = vmatpush.msra.mxu0 %v462
  %536 = vmatpush.msra.mxu0 %v446
  %537 = vmatpush.msra.mxu0 %v365
  %538 = vmatpush.msra.mxu0 %v430
  %539 = vmatpush.msra.mxu0 %v414
  %540 = vmatpush.msra.mxu0 %v398
  %541 = vmatpush.msra.mxu0 %v382
  %542 = vmatmul.f32.gmra.mxu0 %v504
  %v543 = vpop.f32.mrf.mxu0
  %v544 = vadd.f32 %v501, %v543
  %545 = vdwg.mxu0
  %546 = vmatpush.msra.mxu0 0.0
  %547 = vmatpush.msra.mxu0 0.0
  %548 = vmatpush.msra.mxu0 0.0
  %549 = vmatpush.msra.mxu0 0.0
  %550 = vmatpush.msra.mxu0 0.0
  %551 = vmatpush.msra.mxu0 0.0
  %552 = vmatpush.msra.mxu0 0.0
  %553 = vmatpush.msra.mxu0 %v495
  %554 = vmatpush.msra.mxu0 %v479
  %555 = vmatpush.msra.mxu0 %v463
  %556 = vmatpush.msra.mxu0 %v447
  %557 = vmatpush.msra.mxu0 %v366
  %558 = vmatpush.msra.mxu0 %v431
  %559 = vmatpush.msra.mxu0 %v415
  %560 = vmatpush.msra.mxu0 %v399
  %561 = vmatpush.msra.mxu0 %v383
  %562 = vmatmul.f32.gmra.mxu0 %v504
  %v563 = vpop.f32.mrf.mxu0
  %v564 = vadd.f32 %v501, %v563
  %565 = vdwg.mxu0
  %566 = vmatpush.msra.mxu0 0.0
  %567 = vmatpush.msra.mxu0 0.0
  %568 = vmatpush.msra.mxu0 0.0
  %569 = vmatpush.msra.mxu0 0.0
  %570 = vmatpush.msra.mxu0 0.0
  %571 = vmatpush.msra.mxu0 0.0
  %572 = vmatpush.msra.mxu0 0.0
  %573 = vmatpush.msra.mxu0 %v496
  %574 = vmatpush.msra.mxu0 %v480
  %575 = vmatpush.msra.mxu0 %v464
  %576 = vmatpush.msra.mxu0 %v448
  %577 = vmatpush.msra.mxu0 %v367
  %578 = vmatpush.msra.mxu0 %v432
  %579 = vmatpush.msra.mxu0 %v416
  %580 = vmatpush.msra.mxu0 %v400
  %581 = vmatpush.msra.mxu0 %v384
  %582 = vmatmul.f32.gmra.mxu0 %v504
  %v583 = vpop.f32.mrf.mxu0
  %v584 = vadd.f32 %v501, %v583
  %585 = vdwg.mxu0
  %v586 = vld [vmem:[%s7] sm:$0xff]
  %v587 = vld [vmem:[%s8] sm:$0xff]
  %v588 = vadd.f32 %v524, %v544
  %v589 = vadd.f32 %v588, %v564
  %v590 = vadd.f32 %v589, %v584
  %591 = vadd.xlane.f32.xlu0 %v590
  %v592 = vpop.xlane.xlu0 %591
  %v593 = vmul.f32 %v592, 0.001953125
  %v594 = vsub.f32 %v524, %v593
  %v595 = vsub.f32 %v544, %v593
  %v596 = vsub.f32 %v564, %v593
  %v597 = vsub.f32 %v584, %v593
  %v598 = vmul.f32 %v594, %v594
  %v599 = vmul.f32 %v595, %v595
  %v600 = vmul.f32 %v596, %v596
  %v601 = vmul.f32 %v597, %v597
  %v602 = vadd.f32 %v598, %v599
  %v603 = vadd.f32 %v602, %v600
  %v604 = vadd.f32 %v603, %v601
  %605 = vadd.xlane.f32.xlu0 %v604
  %v606 = vpop.xlane.xlu0 %605
  %v607 = vmul.f32 %v606, 0.001953125
  %v608 = vadd.f32 %v607, 1e-05
  %v609 = vrsqrt.pop %v608
  %v610 = vmul.f32 %v609, %v608
  %v611 = vmul.f32 %v610, %v609
  %v612 = vmul.f32 0.5, %v611
  %v613 = vsub.f32 1.5, %v612
  %v614 = vmul.f32 %v609, %v613
  %vm615 = vweird.f32 %v608
  %vm616 = vweird.f32 %v609
  %vm617 = vmor %vm615, %vm616
  %v618 = vsel %vm617, %v609, %v614
  %v619 = vmul.f32 %v586, %v618
  %621 = vset.pattern.permute.xlu0 0
  %622 = vperm.xlu0 %621, %v619
  %v623 = vpop.permute.xlu0 %622
  %v625 = vmul.f32 %v594, %v623
  %v626 = vmul.f32 %v595, %v623
  %v627 = vmul.f32 %v596, %v623
  %v628 = vmul.f32 %v597, %v623
  %630 = vset.pattern.permute.xlu0 0
  %631 = vperm.xlu0 %630, %v587
  %v632 = vpop.permute.xlu0 %631
  %v634 = vadd.f32 %v625, %v632
  %v635 = vadd.f32 %v626, %v632
  %v636 = vadd.f32 %v627, %v632
  %v637 = vadd.f32 %v628, %v632
  %v638 = vmax.f32 %v634, 0.0
  %v639 = vmax.f32 %v635, 0.0
  %v640 = vmax.f32 %v636, 0.0
  %v641 = vmax.f32 %v637, 0.0
  %642 = vst [vmem:[%s9] sm:$0xff] %v638
  %643 = vst [vmem:[%s9 + $0x8] sm:$0xff] %v639
  %644 = vst [vmem:[%s9 + $0x10] sm:$0xff] %v640
  %645 = vst [vmem:[%s9 + $0x18] sm:$0xff] %v641
  // Predicated region
  $region38: #{basic_conv_block_forward.1} parent=0 // pred_check
    _
  $region39: #{basic_conv_block_forward.1} parent=0 // pred_check_branch
    %647 = sbr.rel (0) target = $region41
  $region40: #{basic_conv_block_forward.1} parent=0 // pred_region
    _
  $region41: #{basic_conv_block_forward.1} parent=0 // pred_fallthru
    _
  // Predicated region
  $region42: #{basic_conv_block_forward.1} parent=0 // pred_check
    _
  $region43: #{basic_conv_block_forward.1} parent=0 // pred_check_branch
    %649 = sbr.rel (0) target = $region45
  $region44: #{basic_conv_block_forward.1} parent=0 // pred_region
    _
  $region45: #{basic_conv_block_forward.1} parent=0 // pred_fallthru
    _

</llo_original>
